<compile_context>
chip_gen: v6e
topology: v6e:2x2x1
jax: 0.10.0
libtpu: 0.0.40
codegen_flags: <defaults>
</compile_context>

<pallas_src>
import jax
import jax.numpy as jnp
from jax import lax
from jax.experimental import pallas as pl
from jax.experimental.pallas import tpu as pltpu

HIDDEN = 1024
EPS = 1e-12                   # F.normalize default eps
VMEM_CAP = 48 * 1024 * 1024   # stay well under v7x's 64 MiB physical VMEM


def _round_up(x, m):
    return ((x + m - 1) // m) * m


def mapping_kernel(x_ref, w1_ref, b1_ref, w2_ref, b2_ref, o_ref):
    # x arrives in its original dtype; cast to bf16 on the VPU (cheap, in VMEM) so both
    # matmuls take the fast bf16 MXU path with f32 accumulation.
    x_bf = x_ref[...].astype(jnp.bfloat16)
    h = jnp.dot(x_bf, w1_ref[...], preferred_element_type=jnp.float32)         # (TB, H) f32
    h = jnp.maximum(h + b1_ref[...], 0.0)                                       # bias + ReLU, f32
    y = jnp.dot(h.astype(jnp.bfloat16), w2_ref[...],
                preferred_element_type=jnp.float32)                             # (TB, D_out_p) f32
    y = y + b2_ref[...]
    # F.normalize(p=2, dim=1): y / max(||y||, eps) == y * rsqrt(max(sum(y^2), eps^2)).
    sumsq = jnp.sum(y * y, axis=1, keepdims=True)
    inv_norm = lax.rsqrt(jnp.maximum(sumsq, EPS * EPS))                          # EUP rsqrt, no divide
    o_ref[...] = (y * inv_norm).astype(o_ref.dtype)


def _vmem_bytes(tile_b, d_in, h, d_out_p, out_bytes):
    io = 2 * tile_b * d_in * 4 + 2 * tile_b * d_out_p * out_bytes        # double-buffered x / out tiles
    weights = 2 * ((d_in * h + h * d_out_p) * 2 + (h + d_out_p) * 4)     # bf16 w1/w2 + f32 b1/b2 buffers
    scratch = tile_b * (h * 6 + d_out_p * 4 + d_in * 6)                  # h f32+bf16, y f32, x bf16 copy
    return io + weights + scratch


def _pick_tile(B, tile_b_max, d_in, h, d_out_p, out_bytes):
    tile_b_max = max(16, _round_up(tile_b_max, 16))
    # Shrink the tile cap until the working set fits comfortably under the VMEM cap.
    while tile_b_max > 16 and _vmem_bytes(tile_b_max, d_in, h, d_out_p, out_bytes) > VMEM_CAP:
        tile_b_max = max(16, _round_up(tile_b_max // 2, 16))
    # v7x has 2 TensorCores: keep at least 2 grid steps for batches big enough to split so
    # dimension_semantics=("parallel",) can shard the batch axis across both cores.
    if B >= 32:
        tile_b_max = min(tile_b_max, _round_up(pl.cdiv(B, 2), 16))
    # Choose the tile that minimises batch padding (instead of round_up(B, tile_b)).
    num_tiles = pl.cdiv(B, tile_b_max)
    tile_b = _round_up(pl.cdiv(B, num_tiles), 16)
    return tile_b, num_tiles


def mapping_network(x, w1, b1, w2, b2, *, tile_b=1024):
    """x: (B, D_in). w1: (D_in, 1024), w2: (1024, D_out) — pre-transposed vs. PyTorch."""
    B, D_in = x.shape
    H = w1.shape[1]
    D_out = w2.shape[1]
    out_dtype = x.dtype
    out_bytes = jnp.dtype(out_dtype).itemsize

    # Accept PyTorch-style 1-D biases.
    if b1.ndim == 1:
        b1 = b1.reshape(1, -1)
    if b2.ndim == 1:
        b2 = b2.reshape(1, -1)

    # Lane-dense output: pad output columns up to a multiple of 128 with zeros. Zero columns
    # contribute 0 to the row squared-sum, so normalization is unchanged.
    D_out_p = _round_up(D_out, 128)
    if D_out_p != D_out:
        w2 = jnp.pad(w2, ((0, 0), (0, D_out_p - D_out)))
        b2 = jnp.pad(b2, ((0, 0), (0, D_out_p - D_out)))

    # Guard the resident-weight assumption: w1 and w2 live whole in VMEM with no K/N tiling.
    resident = (D_in * H + H * D_out_p) * 2 + (H + D_out_p) * 4
    if 2 * resident > VMEM_CAP // 2:
        # TODO(synk): add K/N tiling (two-pass normalize) for very large D_in / D_out.
        raise ValueError(
            f"resident weights ({2 * resident} bytes buffered) exceed half the VMEM cap "
            f"({VMEM_CAP} bytes); K/N tiling not implemented")

    tile_b, num_tiles = _pick_tile(B, tile_b, D_in, H, D_out_p, out_bytes)
    B_p = tile_b * num_tiles
    if B_p != B:
        x = jnp.pad(x, ((0, B_p - B), (0, 0)))     # zero rows, dropped below

    # Weights/biases are parameters: cast once outside the hot path. x is NOT pre-cast —
    # the kernel casts it to bf16 in VMEM, saving an extra HBM pass over x.
    w1_bf = w1.astype(jnp.bfloat16)
    w2_bf = w2.astype(jnp.bfloat16)
    b1_f = b1.astype(jnp.float32)
    b2_f = b2.astype(jnp.float32)

    vmem_limit = min(VMEM_CAP,
                     max(32 * 1024 * 1024,
                         int(1.5 * _vmem_bytes(tile_b, D_in, H, D_out_p, out_bytes))))

    cost = pl.CostEstimate(
        flops=2 * B_p * (D_in * H + H * D_out_p),
        transcendentals=B_p,  # one rsqrt per row
        bytes_accessed=(B_p * D_in * x.dtype.itemsize
                        + D_in * H * 2 + H * D_out_p * 2 + (H + D_out_p) * 4
                        + B_p * D_out_p * out_bytes),
    )

    out = pl.pallas_call(
        mapping_kernel,
        out_shape=jax.ShapeDtypeStruct((B_p, D_out_p), out_dtype),
        grid_spec=pltpu.PrefetchScalarGridSpec(
            num_scalar_prefetch=0,
            grid=(num_tiles,),
            in_specs=[
                pl.BlockSpec((tile_b, D_in), lambda i: (i, 0)),     # x tile
                pl.BlockSpec((D_in, H), lambda i: (0, 0)),          # w1 (constant block -> no re-DMA)
                pl.BlockSpec((1, H), lambda i: (0, 0)),             # b1
                pl.BlockSpec((H, D_out_p), lambda i: (0, 0)),       # w2 (constant block -> no re-DMA)
                pl.BlockSpec((1, D_out_p), lambda i: (0, 0)),       # b2
            ],
            out_specs=pl.BlockSpec((tile_b, D_out_p), lambda i: (i, 0)),
        ),
        compiler_params=pltpu.CompilerParams(
            dimension_semantics=("parallel",),   # batch tiles shard across TCs on v7x
            vmem_limit_bytes=vmem_limit,
        ),
        cost_estimate=cost,
    )(x, w1_bf, b1_f, w2_bf, b2_f)

    # Skip the extra HBM read/write when no padding was applied.
    if B_p == B and D_out_p == D_out:
        return out
    return out[:B, :D_out]


def reference_f32(x, w1, b1, w2, b2):
    h = jnp.maximum(x @ w1 + b1, 0.0)
    y = h @ w2 + b2
    n = jnp.maximum(jnp.sqrt(jnp.sum(y * y, axis=1, keepdims=True)), EPS)
    return y / n


if __name__ == "__main__":
    # Small shapes consistent with the module's forward: x (B, input_dim).
    B, D_IN, D_OUT = 8, 32, 64
    key = jax.random.PRNGKey(0)
    kx, k1, k2, k3, k4 = jax.random.split(key, 5)

    x = jax.random.normal(kx, (B, D_IN), dtype=jnp.float32)
    # Deterministic synthetic parameter init (fan-in scaled); biases are 1-D, PyTorch-style.
    w1 = jax.random.normal(k1, (D_IN, HIDDEN), dtype=jnp.float32) * (1.0 / jnp.sqrt(D_IN))
    b1 = jax.random.normal(k2, (HIDDEN,), dtype=jnp.float32) * 0.01
    w2 = jax.random.normal(k3, (HIDDEN, D_OUT), dtype=jnp.float32) * (1.0 / jnp.sqrt(HIDDEN))
    b2 = jax.random.normal(k4, (D_OUT,), dtype=jnp.float32) * 0.01

    out = jax.block_until_ready(mapping_network(x, w1, b1, w2, b2))

    ref = reference_f32(x, w1, b1, w2, b2)
    assert out.shape == (B, D_OUT)
    # bf16 MXU inputs -> looser tolerance vs. the f32 reference.
    assert jnp.allclose(out, ref, atol=2e-2, rtol=2e-2), "mismatch vs. f32 reference"
    # rows must be unit-norm (normalization itself runs in f32).
    assert jnp.allclose(jnp.linalg.norm(out, axis=1), 1.0, atol=1e-4)

    print("KERNEL_OK")
</pallas_src>

<mosaic_0001>
module attributes {stable_mosaic.version = 11 : i64} {
  func.func @mapping_kernel(%arg0: i32, %arg1: memref<16x32xf32, #tpu.memory_space<vmem>>, %arg2: memref<32x1024xbf16, #tpu.memory_space<vmem>>, %arg3: memref<1x1024xf32, #tpu.memory_space<vmem>>, %arg4: memref<1024x128xbf16, #tpu.memory_space<vmem>>, %arg5: memref<1x128xf32, #tpu.memory_space<vmem>>, %arg6: memref<16x128xf32, #tpu.memory_space<vmem>>) attributes {dimension_semantics = [#tpu.dimension_semantics<parallel>], iteration_bounds = array<i64: 1>, scalar_prefetch = 0 : i64, scratch_operands = 0 : i64, tpu.core_type = #tpu.core_type<tc>, window_params = [{transform_indices = @transform_0, window_bounds = array<i64: 16, 32>}, {pipeline_mode = #tpu.pipeline_mode<synchronous>, transform_indices = @transform_1, window_bounds = array<i64: 32, 1024>}, {pipeline_mode = #tpu.pipeline_mode<synchronous>, transform_indices = @transform_2, window_bounds = array<i64: 1, 1024>}, {pipeline_mode = #tpu.pipeline_mode<synchronous>, transform_indices = @transform_3, window_bounds = array<i64: 1024, 128>}, {pipeline_mode = #tpu.pipeline_mode<synchronous>, transform_indices = @transform_4, window_bounds = array<i64: 1, 128>}, {transform_indices = @transform_5, window_bounds = array<i64: 16, 128>}]} {
    %c0 = arith.constant 0 : index
    %c0_0 = arith.constant 0 : index
    %0 = vector.load %arg1[%c0, %c0_0] : memref<16x32xf32, #tpu.memory_space<vmem>>, vector<16x32xf32>
    %1 = arith.truncf %0 : vector<16x32xf32> to vector<16x32xbf16>
    %c0_1 = arith.constant 0 : index
    %c0_2 = arith.constant 0 : index
    %2 = vector.load %arg2[%c0_1, %c0_2] : memref<32x1024xbf16, #tpu.memory_space<vmem>>, vector<32x1024xbf16>
    %cst = arith.constant dense<0.000000e+00> : vector<16x1024xf32>
    %3 = tpu.matmul %1, %2, %cst {dimension_numbers = #tpu.dot_dimension_numbers<[1], [0], [0], [1], [0, 0, 1, 1], [], []>} : vector<16x32xbf16>, vector<32x1024xbf16>, vector<16x1024xf32> -> vector<16x1024xf32>
    %c0_3 = arith.constant 0 : index
    %c0_4 = arith.constant 0 : index
    %4 = vector.load %arg3[%c0_3, %c0_4] : memref<1x1024xf32, #tpu.memory_space<vmem>>, vector<1x1024xf32>
    %5 = vector.broadcast %4 : vector<1x1024xf32> to vector<16x1024xf32>
    %6 = arith.addf %3, %5 : vector<16x1024xf32>
    %cst_5 = arith.constant 0.000000e+00 : f32
    %7 = vector.broadcast %cst_5 : f32 to vector<16x1024xf32>
    %8 = arith.maximumf %6, %7 : vector<16x1024xf32>
    %9 = arith.truncf %8 : vector<16x1024xf32> to vector<16x1024xbf16>
    %c0_6 = arith.constant 0 : index
    %c0_7 = arith.constant 0 : index
    %10 = vector.load %arg4[%c0_6, %c0_7] : memref<1024x128xbf16, #tpu.memory_space<vmem>>, vector<1024x128xbf16>
    %cst_8 = arith.constant dense<0.000000e+00> : vector<16x128xf32>
    %11 = tpu.matmul %9, %10, %cst_8 {dimension_numbers = #tpu.dot_dimension_numbers<[1], [0], [0], [1], [0, 0, 1, 1], [], []>} : vector<16x1024xbf16>, vector<1024x128xbf16>, vector<16x128xf32> -> vector<16x128xf32>
    %c0_9 = arith.constant 0 : index
    %c0_10 = arith.constant 0 : index
    %12 = vector.load %arg5[%c0_9, %c0_10] : memref<1x128xf32, #tpu.memory_space<vmem>>, vector<1x128xf32>
    %13 = vector.broadcast %12 : vector<1x128xf32> to vector<16x128xf32>
    %14 = arith.addf %11, %13 : vector<16x128xf32>
    %15 = arith.mulf %14, %14 : vector<16x128xf32>
    %cst_11 = arith.constant dense<0.000000e+00> : vector<16xf32>
    %16 = vector.multi_reduction <add>, %15, %cst_11 [1] : vector<16x128xf32> to vector<16xf32>
    %17 = vector.shape_cast %16 : vector<16xf32> to vector<16x1xf32>
    %cst_12 = arith.constant 1.000000e-24 : f32
    %18 = vector.broadcast %cst_12 : f32 to vector<16x1xf32>
    %19 = arith.maximumf %17, %18 : vector<16x1xf32>
    %20 = math.rsqrt %19 : vector<16x1xf32>
    %21 = vector.broadcast %20 : vector<16x1xf32> to vector<16x128xf32>
    %22 = arith.mulf %14, %21 : vector<16x128xf32>
    %c0_13 = arith.constant 0 : index
    %c0_14 = arith.constant 0 : index
    %23 = vector.load %arg6[%c0_13, %c0_14] : memref<16x128xf32, #tpu.memory_space<vmem>>, vector<16x128xf32>
    tpu.vector_store %arg6[%c0_13, %c0_14], %22 {strides = array<i32>} : memref<16x128xf32, #tpu.memory_space<vmem>>, vector<16x128xf32>,
    return
  }
  func.func @transform_0(%arg0: i32) -> (i32, i32) {
    %c0_i32 = arith.constant 0 : i32
    %c0_i32_0 = arith.constant 0 : i32
    return %arg0, %c0_i32 : i32, i32
  }
  func.func @transform_1(%arg0: i32) -> (i32, i32) {
    %c0_i32 = arith.constant 0 : i32
    %c0_i32_0 = arith.constant 0 : i32
    %c0_i32_1 = arith.constant 0 : i32
    return %c0_i32, %c0_i32_0 : i32, i32
  }
  func.func @transform_2(%arg0: i32) -> (i32, i32) {
    %c0_i32 = arith.constant 0 : i32
    %c0_i32_0 = arith.constant 0 : i32
    %c0_i32_1 = arith.constant 0 : i32
    return %c0_i32, %c0_i32_0 : i32, i32
  }
  func.func @transform_3(%arg0: i32) -> (i32, i32) {
    %c0_i32 = arith.constant 0 : i32
    %c0_i32_0 = arith.constant 0 : i32
    %c0_i32_1 = arith.constant 0 : i32
    return %c0_i32, %c0_i32_0 : i32, i32
  }
  func.func @transform_4(%arg0: i32) -> (i32, i32) {
    %c0_i32 = arith.constant 0 : i32
    %c0_i32_0 = arith.constant 0 : i32
    %c0_i32_1 = arith.constant 0 : i32
    return %c0_i32, %c0_i32_0 : i32, i32
  }
  func.func @transform_5(%arg0: i32) -> (i32, i32) {
    %c0_i32 = arith.constant 0 : i32
    %c0_i32_0 = arith.constant 0 : i32
    return %arg0, %c0_i32 : i32, i32
  }
}

</mosaic_0001>

<llo_original>
// kernel: tpu_custom_call.1
$region0: #{tpu_custom_call.1}
  #allocation0 [shape = 'u32[]', space=smem, size = 0x4, offset = 0x4, fixed_abs, tag = 'smem constant byte address 0x4 - core index']
  #allocation1 [shape = 'u32[144,128]{1,0:T(1,128)}', space=vmem, size = 0x12000, scoped, tag = 'internal scratch']
  %s0 = inlined_call_operand.hbm [shape: f32[16,32], index: 0, kind: input, shape index: {}]
  %s1 = inlined_call_operand.hbm [shape: bf16[32,1024], index: 1, kind: input, shape index: {}]
  %s2 = inlined_call_operand.hbm [shape: f32[1,1024], index: 2, kind: input, shape index: {}]
  %s3 = inlined_call_operand.hbm [shape: bf16[1024,128], index: 3, kind: input, shape index: {}]
  %s4 = inlined_call_operand.vmem [shape: f32[1,128], index: 4, kind: input, shape index: {}]
  %s5 = inlined_call_operand.hbm [shape: f32[16,128], index: 5, kind: output, shape index: {}]
  %s6 = sld [smem:[#allocation0]]
  $region46: #{tpu_custom_call.1} parent=0
    _
  %s8 = ssub.s32 1, %s6
  %s9 = scalar_select 0, %s8, %s6
  $region1: #{tpu_custom_call.1} parent=0
    #allocation2 [shape = 'u8[8192]{0}', space=vmem, size = 0x2000, scoped, tag = 'input window, operand 0, single buffered']
    #allocation3 [shape = 's32[1]{0}', space=sflag, size = 0x4, scoped, tag = 'scoped memory for tpu_custom_call.1']
    #allocation4 [shape = 's32[1]{0}', space=sflag, size = 0x4, scoped, tag = 'scoped memory for tpu_custom_call.1']
    #allocation5 [shape = 'u8[65536]{0}', space=vmem, size = 0x10000, scoped, tag = 'input window, operand 1, single buffered']
    #allocation6 [shape = 's32[1]{0}', space=sflag, size = 0x4, scoped, tag = 'scoped memory for tpu_custom_call.1']
    #allocation7 [shape = 'u8[4096]{0}', space=vmem, size = 0x1000, scoped, tag = 'input window, operand 2, single buffered']
    #allocation8 [shape = 'u8[262144]{0}', space=vmem, size = 0x40000, scoped, tag = 'input window, operand 3, single buffered']
    #allocation9 [shape = 's32[1]{0}', space=sflag, size = 0x4, scoped, tag = 'scoped memory for tpu_custom_call.1']
    #allocation10 [shape = 'u8[8192]{0}', space=vmem, size = 0x2000, scoped, tag = 'output window, operand 0, single buffered']
    %10 = vsyncpa [#allocation3], 0
    %11 = vsyncpa [#allocation6], 0
    %12 = vsyncpa [#allocation9], 0
    %13 = vsyncpa [#allocation4], 0
    // Predicated region
    $region2: #{tpu_custom_call.1} parent=1 // pred_check
      _
    $region3: #{tpu_custom_call.1} parent=1 // pred_check_branch
      %15 = sbr.rel (0) target = $region5
    $region4: #{tpu_custom_call.1} parent=1 // pred_region
      %s17 = ssub.s32 256, 256
      %18 = vsyncadd [#allocation3], %s17
      %s19 = sshll.u32 [#allocation2], 4
      %s20 = int_to_ptr.vmem [resolvable:$true] %s19
      %25 = dma.hbm_to_vmem [thread:$0]  %s0, 256, %s20, [#allocation3], 128, 128, 8
    $region5: #{tpu_custom_call.1} parent=1 // pred_fallthru
      _
    // Predicated region
    $region6: #{tpu_custom_call.1} parent=1 // pred_check
      _
    $region7: #{tpu_custom_call.1} parent=1 // pred_check_branch
      %27 = sbr.rel (0) target = $region9
    $region8: #{tpu_custom_call.1} parent=1 // pred_region
      %s29 = ssub.s32 2048, 2048
      %30 = vsyncadd [#allocation6], %s29
      %s31 = sshll.u32 [#allocation5], 4
      %s32 = int_to_ptr.vmem [resolvable:$true] %s31
      %37 = dma.hbm_to_vmem [thread:$0]  %s1, 2048, %s32, [#allocation6], 512, 512, 32
    $region9: #{tpu_custom_call.1} parent=1 // pred_fallthru
      _
    // Predicated region
    $region10: #{tpu_custom_call.1} parent=1 // pred_check
      _
    $region11: #{tpu_custom_call.1} parent=1 // pred_check_branch
      %39 = sbr.rel (0) target = $region13
    $region12: #{tpu_custom_call.1} parent=1 // pred_region
      %s41 = ssub.s32 128, 128
      %42 = vsyncadd [#allocation6], %s41
      %s44 = sshll.u32 [#allocation7], 4
      %s45 = int_to_ptr.vmem [resolvable:$true] %s44
      %47 = dma.hbm_to_vmem [thread:$0]  %s2, 128, %s45, [#allocation6]
    $region13: #{tpu_custom_call.1} parent=1 // pred_fallthru
      _
    // Predicated region
    $region14: #{tpu_custom_call.1} parent=1 // pred_check
      _
    $region15: #{tpu_custom_call.1} parent=1 // pred_check_branch
      %49 = sbr.rel (0) target = $region17
    $region16: #{tpu_custom_call.1} parent=1 // pred_region
      %s51 = ssub.s32 8192, 8192
      %52 = vsyncadd [#allocation9], %s51
      %s53 = sshll.u32 [#allocation8], 4
      %s54 = int_to_ptr.vmem [resolvable:$true] %s53
      %59 = dma.hbm_to_vmem [thread:$0]  %s3, 8192, %s54, [#allocation9], 64, 64, 4
    $region17: #{tpu_custom_call.1} parent=1 // pred_fallthru
      _
    // Predicated region
    $region18: #{tpu_custom_call.1} parent=1 // pred_check
      _
    $region19: #{tpu_custom_call.1} parent=1 // pred_check_branch
      %61 = sbr.rel (0) target = $region21
    $region20: #{tpu_custom_call.1} parent=1 // pred_region
      _
    $region21: #{tpu_custom_call.1} parent=1 // pred_fallthru
      _
    // Predicated region
    $region22: #{tpu_custom_call.1} parent=1 // pred_check
      _
    $region23: #{tpu_custom_call.1} parent=1 // pred_check_branch
      %63 = sbr.rel (0) target = $region25
    $region24: #{tpu_custom_call.1} parent=1 // pred_region
      %64 = dma.done [#allocation3], 256
    $region25: #{tpu_custom_call.1} parent=1 // pred_fallthru
      _
    // Predicated region
    $region26: #{tpu_custom_call.1} parent=1 // pred_check
      _
    $region27: #{tpu_custom_call.1} parent=1 // pred_check_branch
      %66 = sbr.rel (0) target = $region29
    $region28: #{tpu_custom_call.1} parent=1 // pred_region
      %67 = dma.done [#allocation6], 2048
    $region29: #{tpu_custom_call.1} parent=1 // pred_fallthru
      _
    // Predicated region
    $region30: #{tpu_custom_call.1} parent=1 // pred_check
      _
    $region31: #{tpu_custom_call.1} parent=1 // pred_check_branch
      %69 = sbr.rel (0) target = $region33
    $region32: #{tpu_custom_call.1} parent=1 // pred_region
      %70 = dma.done [#allocation6], 128
    $region33: #{tpu_custom_call.1} parent=1 // pred_fallthru
      _
    // Predicated region
    $region34: #{tpu_custom_call.1} parent=1 // pred_check
      _
    $region35: #{tpu_custom_call.1} parent=1 // pred_check_branch
      %72 = sbr.rel (0) target = $region37
    $region36: #{tpu_custom_call.1} parent=1 // pred_region
      %73 = dma.done [#allocation9], 8192
    $region37: #{tpu_custom_call.1} parent=1 // pred_fallthru
      _
    %v75 = vld [vmem:[#allocation2] sm:$0xff]
    %v76 = vld [vmem:[#allocation2 + $0x8] sm:$0xff]
    %v77 = vpack.c.bf16 %v76, %v75
    %v78 = vld [vmem:[#allocation5] sm:$0xff]
    %v79 = vld [vmem:[#allocation5 + $0x8] sm:$0xff]
    %v80 = vld [vmem:[#allocation5 + $0x10] sm:$0xff]
    %v81 = vld [vmem:[#allocation5 + $0x18] sm:$0xff]
    %v82 = vld [vmem:[#allocation5 + $0x20] sm:$0xff]
    %v83 = vld [vmem:[#allocation5 + $0x28] sm:$0xff]
    %v84 = vld [vmem:[#allocation5 + $0x30] sm:$0xff]
    %v85 = vld [vmem:[#allocation5 + $0x38] sm:$0xff]
    %v86 = vld [vmem:[#allocation5 + $0x40] sm:$0xff]
    %v87 = vld [vmem:[#allocation5 + $0x48] sm:$0xff]
    %v88 = vld [vmem:[#allocation5 + $0x50] sm:$0xff]
    %v89 = vld [vmem:[#allocation5 + $0x58] sm:$0xff]
    %v90 = vld [vmem:[#allocation5 + $0x60] sm:$0xff]
    %v91 = vld [vmem:[#allocation5 + $0x68] sm:$0xff]
    %v92 = vld [vmem:[#allocation5 + $0x70] sm:$0xff]
    %v93 = vld [vmem:[#allocation5 + $0x78] sm:$0xff]
    %v94 = vld [vmem:[#allocation7] sm:$0xff]
    %v96 = vlaneseq
    %v97 = vshrl.u32 %v96, 7
    %v98 = vsub.s32 0, %v97
    %v99 = vrot.slane %v94, %v98
    %v100 = vlaneseq
    %v101 = vshrl.u32 %v100, 7
    %v102 = vsub.s32 1, %v101
    %v103 = vrot.slane %v94, %v102
    %v104 = vlaneseq
    %v105 = vshrl.u32 %v104, 7
    %v106 = vsub.s32 2, %v105
    %v107 = vrot.slane %v94, %v106
    %v108 = vlaneseq
    %v109 = vshrl.u32 %v108, 7
    %v110 = vsub.s32 3, %v109
    %v111 = vrot.slane %v94, %v110
    %v112 = vlaneseq
    %v113 = vshrl.u32 %v112, 7
    %v114 = vsub.s32 4, %v113
    %v115 = vrot.slane %v94, %v114
    %v116 = vlaneseq
    %v117 = vshrl.u32 %v116, 7
    %v118 = vsub.s32 5, %v117
    %v119 = vrot.slane %v94, %v118
    %v120 = vlaneseq
    %v121 = vshrl.u32 %v120, 7
    %v122 = vsub.s32 6, %v121
    %v123 = vrot.slane %v94, %v122
    %v124 = vlaneseq
    %v125 = vshrl.u32 %v124, 7
    %v126 = vsub.s32 7, %v125
    %v127 = vrot.slane %v94, %v126
    %v152 = vunpack.c.l.b16 %v78
    %v153 = vunpack.c.h.b16 %v78
    %v154 = vunpack.c.l.b16 %v79
    %v155 = vunpack.c.h.b16 %v79
    %v156 = vunpack.c.l.b16 %v80
    %v157 = vunpack.c.h.b16 %v80
    %v158 = vunpack.c.l.b16 %v81
    %v159 = vunpack.c.h.b16 %v81
    %v160 = vunpack.c.l.b16 %v82
    %v161 = vunpack.c.h.b16 %v82
    %v162 = vunpack.c.l.b16 %v83
    %v163 = vunpack.c.h.b16 %v83
    %v164 = vunpack.c.l.b16 %v84
    %v165 = vunpack.c.h.b16 %v84
    %v166 = vunpack.c.l.b16 %v85
    %v167 = vunpack.c.h.b16 %v85
    %v168 = vunpack.c.l.b16 %v86
    %v169 = vunpack.c.h.b16 %v86
    %v170 = vunpack.c.l.b16 %v87
    %v171 = vunpack.c.h.b16 %v87
    %v172 = vunpack.c.l.b16 %v88
    %v173 = vunpack.c.h.b16 %v88
    %v174 = vunpack.c.l.b16 %v89
    %v175 = vunpack.c.h.b16 %v89
    %v176 = vunpack.c.l.b16 %v90
    %v177 = vunpack.c.h.b16 %v90
    %v178 = vunpack.c.l.b16 %v91
    %v179 = vunpack.c.h.b16 %v91
    %v180 = vunpack.c.l.b16 %v92
    %v181 = vunpack.c.h.b16 %v92
    %v182 = vunpack.c.l.b16 %v93
    %v183 = vunpack.c.h.b16 %v93
    %v184 = vpack.c.b16 %v160, %v152
    %v185 = vpack.c.b16 %v161, %v153
    %v186 = vpack.c.b16 %v162, %v154
    %v187 = vpack.c.b16 %v163, %v155
    %v188 = vpack.c.b16 %v164, %v156
    %v189 = vpack.c.b16 %v165, %v157
    %v190 = vpack.c.b16 %v166, %v158
    %v191 = vpack.c.b16 %v167, %v159
    %v192 = vpack.c.b16 %v176, %v168
    %v193 = vpack.c.b16 %v177, %v169
    %v194 = vpack.c.b16 %v178, %v170
    %v195 = vpack.c.b16 %v179, %v171
    %v196 = vpack.c.b16 %v180, %v172
    %v197 = vpack.c.b16 %v181, %v173
    %v198 = vpack.c.b16 %v182, %v174
    %v199 = vpack.c.b16 %v183, %v175
    %vm216 = vcmask 261120
    %v218 = vsel %vm216, %v77, 0
    %220 = vmatprep.subr.bf16.mxu0 0
    %221 = vmatpush1.bf16.msra.mxu0 0
    %222 = vmatprep.subr.bf16.mxu0 0
    %223 = vmatpush1.bf16.msra.mxu0 0
    %224 = vmatprep.subr.bf16.mxu0 0
    %225 = vmatpush1.bf16.msra.mxu0 0
    %226 = vmatprep.subr.bf16.mxu0 0
    %227 = vmatpush1.bf16.msra.mxu0 0
    %228 = vmatprep.subr.bf16.mxu0 0
    %229 = vmatpush1.bf16.msra.mxu0 0
    %230 = vmatprep.subr.bf16.mxu0 0
    %231 = vmatpush1.bf16.msra.mxu0 0
    %232 = vmatprep.subr.bf16.mxu0 %v193
    %233 = vmatpush1.bf16.msra.mxu0 %v192
    %234 = vmatprep.subr.bf16.mxu0 %v185
    %235 = vmatpush1.bf16.msra.mxu0 %v184
    %236 = vmatprep.subr.bf16.mxu0 0
    %237 = vmatpush2.bf16.msra.mxu0 0
    %238 = vmatprep.subr.bf16.mxu0 0
    %239 = vmatpush2.bf16.msra.mxu0 0
    %240 = vmatprep.subr.bf16.mxu0 0
    %241 = vmatpush2.bf16.msra.mxu0 0
    %242 = vmatprep.subr.bf16.mxu0 0
    %243 = vmatpush2.bf16.msra.mxu0 0
    %244 = vmatprep.subr.bf16.mxu0 0
    %245 = vmatpush2.bf16.msra.mxu0 0
    %246 = vmatprep.subr.bf16.mxu0 0
    %247 = vmatpush2.bf16.msra.mxu0 0
    %248 = vmatprep.subr.bf16.mxu0 0
    %249 = vmatpush2.bf16.msra.mxu0 0
    %250 = vmatprep.subr.bf16.mxu0 0
    %251 = vmatpush2.bf16.msra.mxu0 0
    %252 = vmatprep.mubr.bf16.mxu0 0
    %253 = vmatmul.mubr.bf16.gmra.mxu0 %v218
    %v254 = vpop.f32.mrf.mxu0
    %v255 = vadd.f32 %v99, %v254
    %v256 = vpop.f32.mrf.mxu0
    %v257 = vadd.f32 %v103, %v256
    %v258 = vpop.f32.mrf.mxu0
    %v259 = vadd.f32 %v99, %v258
    %v260 = vpop.f32.mrf.mxu0
    %v261 = vadd.f32 %v103, %v260
    %262 = vdwg.mxu0
    %263 = vmatprep.subr.bf16.mxu0 0
    %264 = vmatpush1.bf16.msra.mxu0 0
    %265 = vmatprep.subr.bf16.mxu0 0
    %266 = vmatpush1.bf16.msra.mxu0 0
    %267 = vmatprep.subr.bf16.mxu0 0
    %268 = vmatpush1.bf16.msra.mxu0 0
    %269 = vmatprep.subr.bf16.mxu0 0
    %270 = vmatpush1.bf16.msra.mxu0 0
    %271 = vmatprep.subr.bf16.mxu0 0
    %272 = vmatpush1.bf16.msra.mxu0 0
    %273 = vmatprep.subr.bf16.mxu0 0
    %274 = vmatpush1.bf16.msra.mxu0 0
    %275 = vmatprep.subr.bf16.mxu0 %v195
    %276 = vmatpush1.bf16.msra.mxu0 %v194
    %277 = vmatprep.subr.bf16.mxu0 %v187
    %278 = vmatpush1.bf16.msra.mxu0 %v186
    %279 = vmatprep.subr.bf16.mxu0 0
    %280 = vmatpush2.bf16.msra.mxu0 0
    %281 = vmatprep.subr.bf16.mxu0 0
    %282 = vmatpush2.bf16.msra.mxu0 0
    %283 = vmatprep.subr.bf16.mxu0 0
    %284 = vmatpush2.bf16.msra.mxu0 0
    %285 = vmatprep.subr.bf16.mxu0 0
    %286 = vmatpush2.bf16.msra.mxu0 0
    %287 = vmatprep.subr.bf16.mxu0 0
    %288 = vmatpush2.bf16.msra.mxu0 0
    %289 = vmatprep.subr.bf16.mxu0 0
    %290 = vmatpush2.bf16.msra.mxu0 0
    %291 = vmatprep.subr.bf16.mxu0 0
    %292 = vmatpush2.bf16.msra.mxu0 0
    %293 = vmatprep.subr.bf16.mxu0 0
    %294 = vmatpush2.bf16.msra.mxu0 0
    %295 = vmatprep.mubr.bf16.mxu0 0
    %296 = vmatmul.mubr.bf16.gmra.mxu0 %v218
    %v297 = vpop.f32.mrf.mxu0
    %v298 = vadd.f32 %v107, %v297
    %v299 = vpop.f32.mrf.mxu0
    %v300 = vadd.f32 %v111, %v299
    %v301 = vpop.f32.mrf.mxu0
    %v302 = vadd.f32 %v107, %v301
    %v303 = vpop.f32.mrf.mxu0
    %v304 = vadd.f32 %v111, %v303
    %305 = vdwg.mxu0
    %306 = vmatprep.subr.bf16.mxu0 0
    %307 = vmatpush1.bf16.msra.mxu0 0
    %308 = vmatprep.subr.bf16.mxu0 0
    %309 = vmatpush1.bf16.msra.mxu0 0
    %310 = vmatprep.subr.bf16.mxu0 0
    %311 = vmatpush1.bf16.msra.mxu0 0
    %312 = vmatprep.subr.bf16.mxu0 0
    %313 = vmatpush1.bf16.msra.mxu0 0
    %314 = vmatprep.subr.bf16.mxu0 0
    %315 = vmatpush1.bf16.msra.mxu0 0
    %316 = vmatprep.subr.bf16.mxu0 0
    %317 = vmatpush1.bf16.msra.mxu0 0
    %318 = vmatprep.subr.bf16.mxu0 %v197
    %319 = vmatpush1.bf16.msra.mxu0 %v196
    %320 = vmatprep.subr.bf16.mxu0 %v189
    %321 = vmatpush1.bf16.msra.mxu0 %v188
    %322 = vmatprep.subr.bf16.mxu0 0
    %323 = vmatpush2.bf16.msra.mxu0 0
    %324 = vmatprep.subr.bf16.mxu0 0
    %325 = vmatpush2.bf16.msra.mxu0 0
    %326 = vmatprep.subr.bf16.mxu0 0
    %327 = vmatpush2.bf16.msra.mxu0 0
    %328 = vmatprep.subr.bf16.mxu0 0
    %329 = vmatpush2.bf16.msra.mxu0 0
    %330 = vmatprep.subr.bf16.mxu0 0
    %331 = vmatpush2.bf16.msra.mxu0 0
    %332 = vmatprep.subr.bf16.mxu0 0
    %333 = vmatpush2.bf16.msra.mxu0 0
    %334 = vmatprep.subr.bf16.mxu0 0
    %335 = vmatpush2.bf16.msra.mxu0 0
    %336 = vmatprep.subr.bf16.mxu0 0
    %337 = vmatpush2.bf16.msra.mxu0 0
    %338 = vmatprep.mubr.bf16.mxu0 0
    %339 = vmatmul.mubr.bf16.gmra.mxu0 %v218
    %v340 = vpop.f32.mrf.mxu0
    %v341 = vadd.f32 %v115, %v340
    %v342 = vpop.f32.mrf.mxu0
    %v343 = vadd.f32 %v119, %v342
    %v344 = vpop.f32.mrf.mxu0
    %v345 = vadd.f32 %v115, %v344
    %v346 = vpop.f32.mrf.mxu0
    %v347 = vadd.f32 %v119, %v346
    %348 = vdwg.mxu0
    %349 = vmatprep.subr.bf16.mxu0 0
    %350 = vmatpush1.bf16.msra.mxu0 0
    %351 = vmatprep.subr.bf16.mxu0 0
    %352 = vmatpush1.bf16.msra.mxu0 0
    %353 = vmatprep.subr.bf16.mxu0 0
    %354 = vmatpush1.bf16.msra.mxu0 0
    %355 = vmatprep.subr.bf16.mxu0 0
    %356 = vmatpush1.bf16.msra.mxu0 0
    %357 = vmatprep.subr.bf16.mxu0 0
    %358 = vmatpush1.bf16.msra.mxu0 0
    %359 = vmatprep.subr.bf16.mxu0 0
    %360 = vmatpush1.bf16.msra.mxu0 0
    %361 = vmatprep.subr.bf16.mxu0 %v199
    %362 = vmatpush1.bf16.msra.mxu0 %v198
    %363 = vmatprep.subr.bf16.mxu0 %v191
    %364 = vmatpush1.bf16.msra.mxu0 %v190
    %365 = vmatprep.subr.bf16.mxu0 0
    %366 = vmatpush2.bf16.msra.mxu0 0
    %367 = vmatprep.subr.bf16.mxu0 0
    %368 = vmatpush2.bf16.msra.mxu0 0
    %369 = vmatprep.subr.bf16.mxu0 0
    %370 = vmatpush2.bf16.msra.mxu0 0
    %371 = vmatprep.subr.bf16.mxu0 0
    %372 = vmatpush2.bf16.msra.mxu0 0
    %373 = vmatprep.subr.bf16.mxu0 0
    %374 = vmatpush2.bf16.msra.mxu0 0
    %375 = vmatprep.subr.bf16.mxu0 0
    %376 = vmatpush2.bf16.msra.mxu0 0
    %377 = vmatprep.subr.bf16.mxu0 0
    %378 = vmatpush2.bf16.msra.mxu0 0
    %379 = vmatprep.subr.bf16.mxu0 0
    %380 = vmatpush2.bf16.msra.mxu0 0
    %381 = vmatprep.mubr.bf16.mxu0 0
    %382 = vmatmul.mubr.bf16.gmra.mxu0 %v218
    %v383 = vpop.f32.mrf.mxu0
    %v384 = vadd.f32 %v123, %v383
    %v385 = vpop.f32.mrf.mxu0
    %v386 = vadd.f32 %v127, %v385
    %v387 = vpop.f32.mrf.mxu0
    %v388 = vadd.f32 %v123, %v387
    %v389 = vpop.f32.mrf.mxu0
    %v390 = vadd.f32 %v127, %v389
    %391 = vdwg.mxu0
    %v392 = vmax.f32 %v255, 0.0
    %v393 = vmax.f32 %v257, 0.0
    %v394 = vmax.f32 %v298, 0.0
    %v395 = vmax.f32 %v300, 0.0
    %v396 = vmax.f32 %v341, 0.0
    %v397 = vmax.f32 %v343, 0.0
    %v398 = vmax.f32 %v384, 0.0
    %v399 = vmax.f32 %v386, 0.0
    %v400 = vmax.f32 %v259, 0.0
    %v401 = vmax.f32 %v261, 0.0
    %v402 = vmax.f32 %v302, 0.0
    %v403 = vmax.f32 %v304, 0.0
    %v404 = vmax.f32 %v345, 0.0
    %v405 = vmax.f32 %v347, 0.0
    %v406 = vmax.f32 %v388, 0.0
    %v407 = vmax.f32 %v390, 0.0
    %v408 = vpack.c.bf16 %v400, %v392
    %v409 = vpack.c.bf16 %v401, %v393
    %v410 = vpack.c.bf16 %v402, %v394
    %v411 = vpack.c.bf16 %v403, %v395
    %v412 = vpack.c.bf16 %v404, %v396
    %v413 = vpack.c.bf16 %v405, %v397
    %v414 = vpack.c.bf16 %v406, %v398
    %v415 = vpack.c.bf16 %v407, %v399
    %v416 = vld [vmem:[#allocation8] sm:$0xf]
    %v417 = vld [vmem:[#allocation8 + $0x4] sm:$0xf]
    %v418 = vld [vmem:[#allocation8 + $0x8] sm:$0xf]
    %v419 = vld [vmem:[#allocation8 + $0xc] sm:$0xf]
    %v420 = vld [vmem:[#allocation8 + $0x10] sm:$0xf]
    %v421 = vld [vmem:[#allocation8 + $0x14] sm:$0xf]
    %v422 = vld [vmem:[#allocation8 + $0x18] sm:$0xf]
    %v423 = vld [vmem:[#allocation8 + $0x1c] sm:$0xf]
    %v424 = vld [vmem:[#allocation8 + $0x20] sm:$0xf]
    %v425 = vld [vmem:[#allocation8 + $0x24] sm:$0xf]
    %v426 = vld [vmem:[#allocation8 + $0x28] sm:$0xf]
    %v427 = vld [vmem:[#allocation8 + $0x2c] sm:$0xf]
    %v428 = vld [vmem:[#allocation8 + $0x30] sm:$0xf]
    %v429 = vld [vmem:[#allocation8 + $0x34] sm:$0xf]
    %v430 = vld [vmem:[#allocation8 + $0x38] sm:$0xf]
    %v431 = vld [vmem:[#allocation8 + $0x3c] sm:$0xf]
    %v432 = vld [vmem:[#allocation8 + $0x40] sm:$0xf]
    %v433 = vld [vmem:[#allocation8 + $0x44] sm:$0xf]
    %v434 = vld [vmem:[#allocation8 + $0x48] sm:$0xf]
    %v435 = vld [vmem:[#allocation8 + $0x4c] sm:$0xf]
    %v436 = vld [vmem:[#allocation8 + $0x50] sm:$0xf]
    %v437 = vld [vmem:[#allocation8 + $0x54] sm:$0xf]
    %v438 = vld [vmem:[#allocation8 + $0x58] sm:$0xf]
    %v439 = vld [vmem:[#allocation8 + $0x5c] sm:$0xf]
    %v440 = vld [vmem:[#allocation8 + $0x60] sm:$0xf]
    %v441 = vld [vmem:[#allocation8 + $0x64] sm:$0xf]
    %v442 = vld [vmem:[#allocation8 + $0x68] sm:$0xf]
    %v443 = vld [vmem:[#allocation8 + $0x6c] sm:$0xf]
    %v444 = vld [vmem:[#allocation8 + $0x70] sm:$0xf]
    %v445 = vld [vmem:[#allocation8 + $0x74] sm:$0xf]
    %v446 = vld [vmem:[#allocation8 + $0x78] sm:$0xf]
    %v447 = vld [vmem:[#allocation8 + $0x7c] sm:$0xf]
    %v448 = vld [vmem:[#allocation8 + $0x80] sm:$0xf]
    %v449 = vld [vmem:[#allocation8 + $0x84] sm:$0xf]
    %v450 = vld [vmem:[#allocation8 + $0x88] sm:$0xf]
    %v451 = vld [vmem:[#allocation8 + $0x8c] sm:$0xf]
    %v452 = vld [vmem:[#allocation8 + $0x90] sm:$0xf]
    %v453 = vld [vmem:[#allocation8 + $0x94] sm:$0xf]
    %v454 = vld [vmem:[#allocation8 + $0x98] sm:$0xf]
    %v455 = vld [vmem:[#allocation8 + $0x9c] sm:$0xf]
    %v456 = vld [vmem:[#allocation8 + $0xa0] sm:$0xf]
    %v457 = vld [vmem:[#allocation8 + $0xa4] sm:$0xf]
    %v458 = vld [vmem:[#allocation8 + $0xa8] sm:$0xf]
    %v459 = vld [vmem:[#allocation8 + $0xac] sm:$0xf]
    %v460 = vld [vmem:[#allocation8 + $0xb0] sm:$0xf]
    %v461 = vld [vmem:[#allocation8 + $0xb4] sm:$0xf]
    %v462 = vld [vmem:[#allocation8 + $0xb8] sm:$0xf]
    %v463 = vld [vmem:[#allocation8 + $0xbc] sm:$0xf]
    %v464 = vld [vmem:[#allocation8 + $0xc0] sm:$0xf]
    %v465 = vld [vmem:[#allocation8 + $0xc4] sm:$0xf]
    %v466 = vld [vmem:[#allocation8 + $0xc8] sm:$0xf]
    %v467 = vld [vmem:[#allocation8 + $0xcc] sm:$0xf]
    %v468 = vld [vmem:[#allocation8 + $0xd0] sm:$0xf]
    %v469 = vld [vmem:[#allocation8 + $0xd4] sm:$0xf]
    %v470 = vld [vmem:[#allocation8 + $0xd8] sm:$0xf]
    %v471 = vld [vmem:[#allocation8 + $0xdc] sm:$0xf]
    %v472 = vld [vmem:[#allocation8 + $0xe0] sm:$0xf]
    %v473 = vld [vmem:[#allocation8 + $0xe4] sm:$0xf]
    %v474 = vld [vmem:[#allocation8 + $0xe8] sm:$0xf]
    %v475 = vld [vmem:[#allocation8 + $0xec] sm:$0xf]
    %v476 = vld [vmem:[#allocation8 + $0xf0] sm:$0xf]
    %v477 = vld [vmem:[#allocation8 + $0xf4] sm:$0xf]
    %v478 = vld [vmem:[#allocation8 + $0xf8] sm:$0xf]
    %v479 = vld [vmem:[#allocation8 + $0xfc] sm:$0xf]
    %v480 = vld [vmem:[#allocation8 + $0x100] sm:$0xf]
    %v481 = vld [vmem:[#allocation8 + $0x104] sm:$0xf]
    %v482 = vld [vmem:[#allocation8 + $0x108] sm:$0xf]
    %v483 = vld [vmem:[#allocation8 + $0x10c] sm:$0xf]
    %v484 = vld [vmem:[#allocation8 + $0x110] sm:$0xf]
    %v485 = vld [vmem:[#allocation8 + $0x114] sm:$0xf]
    %v486 = vld [vmem:[#allocation8 + $0x118] sm:$0xf]
    %v487 = vld [vmem:[#allocation8 + $0x11c] sm:$0xf]
    %v488 = vld [vmem:[#allocation8 + $0x120] sm:$0xf]
    %v489 = vld [vmem:[#allocation8 + $0x124] sm:$0xf]
    %v490 = vld [vmem:[#allocation8 + $0x128] sm:$0xf]
    %v491 = vld [vmem:[#allocation8 + $0x12c] sm:$0xf]
    %v492 = vld [vmem:[#allocation8 + $0x130] sm:$0xf]
    %v493 = vld [vmem:[#allocation8 + $0x134] sm:$0xf]
    %v494 = vld [vmem:[#allocation8 + $0x138] sm:$0xf]
    %v495 = vld [vmem:[#allocation8 + $0x13c] sm:$0xf]
    %v496 = vld [vmem:[#allocation8 + $0x140] sm:$0xf]
    %v497 = vld [vmem:[#allocation8 + $0x144] sm:$0xf]
    %v498 = vld [vmem:[#allocation8 + $0x148] sm:$0xf]
    %v499 = vld [vmem:[#allocation8 + $0x14c] sm:$0xf]
    %v500 = vld [vmem:[#allocation8 + $0x150] sm:$0xf]
    %v501 = vld [vmem:[#allocation8 + $0x154] sm:$0xf]
    %v502 = vld [vmem:[#allocation8 + $0x158] sm:$0xf]
    %v503 = vld [vmem:[#allocation8 + $0x15c] sm:$0xf]
    %v504 = vld [vmem:[#allocation8 + $0x160] sm:$0xf]
    %v505 = vld [vmem:[#allocation8 + $0x164] sm:$0xf]
    %v506 = vld [vmem:[#allocation8 + $0x168] sm:$0xf]
    %v507 = vld [vmem:[#allocation8 + $0x16c] sm:$0xf]
    %v508 = vld [vmem:[#allocation8 + $0x170] sm:$0xf]
    %v509 = vld [vmem:[#allocation8 + $0x174] sm:$0xf]
    %v510 = vld [vmem:[#allocation8 + $0x178] sm:$0xf]
    %v511 = vld [vmem:[#allocation8 + $0x17c] sm:$0xf]
    %v512 = vld [vmem:[#allocation8 + $0x180] sm:$0xf]
    %v513 = vld [vmem:[#allocation8 + $0x184] sm:$0xf]
    %v514 = vld [vmem:[#allocation8 + $0x188] sm:$0xf]
    %v515 = vld [vmem:[#allocation8 + $0x18c] sm:$0xf]
    %v516 = vld [vmem:[#allocation8 + $0x190] sm:$0xf]
    %v517 = vld [vmem:[#allocation8 + $0x194] sm:$0xf]
    %v518 = vld [vmem:[#allocation8 + $0x198] sm:$0xf]
    %v519 = vld [vmem:[#allocation8 + $0x19c] sm:$0xf]
    %v520 = vld [vmem:[#allocation8 + $0x1a0] sm:$0xf]
    %v521 = vld [vmem:[#allocation8 + $0x1a4] sm:$0xf]
    %v522 = vld [vmem:[#allocation8 + $0x1a8] sm:$0xf]
    %v523 = vld [vmem:[#allocation8 + $0x1ac] sm:$0xf]
    %v524 = vld [vmem:[#allocation8 + $0x1b0] sm:$0xf]
    %v525 = vld [vmem:[#allocation8 + $0x1b4] sm:$0xf]
    %v526 = vld [vmem:[#allocation8 + $0x1b8] sm:$0xf]
    %v527 = vld [vmem:[#allocation8 + $0x1bc] sm:$0xf]
    %v528 = vld [vmem:[#allocation8 + $0x1c0] sm:$0xf]
    %v529 = vld [vmem:[#allocation8 + $0x1c4] sm:$0xf]
    %v530 = vld [vmem:[#allocation8 + $0x1c8] sm:$0xf]
    %v531 = vld [vmem:[#allocation8 + $0x1cc] sm:$0xf]
    %v532 = vld [vmem:[#allocation8 + $0x1d0] sm:$0xf]
    %v533 = vld [vmem:[#allocation8 + $0x1d4] sm:$0xf]
    %v534 = vld [vmem:[#allocation8 + $0x1d8] sm:$0xf]
    %v535 = vld [vmem:[#allocation8 + $0x1dc] sm:$0xf]
    %v536 = vld [vmem:[#allocation8 + $0x1e0] sm:$0xf]
    %v537 = vld [vmem:[#allocation8 + $0x1e4] sm:$0xf]
    %v538 = vld [vmem:[#allocation8 + $0x1e8] sm:$0xf]
    %v539 = vld [vmem:[#allocation8 + $0x1ec] sm:$0xf]
    %v540 = vld [vmem:[#allocation8 + $0x1f0] sm:$0xf]
    %v541 = vld [vmem:[#allocation8 + $0x1f4] sm:$0xf]
    %v542 = vld [vmem:[#allocation8 + $0x1f8] sm:$0xf]
    %v543 = vld [vmem:[#allocation8 + $0x1fc] sm:$0xf]
    %v544 = vld [vmem:[%s4] sm:$0x1]
    %v546 = vlaneseq
    %v547 = vshrl.u32 %v546, 7
    %v548 = vsub.s32 0, %v547
    %v549 = vrot.slane %v544, %v548
    %v679 = vunpack.c.l.b16 %v416
    %v680 = vunpack.c.l.b16 %v417
    %v681 = vunpack.c.l.b16 %v418
    %v682 = vunpack.c.l.b16 %v419
    %v683 = vunpack.c.l.b16 %v420
    %v684 = vunpack.c.l.b16 %v421
    %v685 = vunpack.c.l.b16 %v422
    %v686 = vunpack.c.l.b16 %v423
    %v687 = vunpack.c.l.b16 %v424
    %v688 = vunpack.c.l.b16 %v425
    %v689 = vunpack.c.l.b16 %v426
    %v690 = vunpack.c.l.b16 %v427
    %v691 = vunpack.c.l.b16 %v428
    %v692 = vunpack.c.l.b16 %v429
    %v693 = vunpack.c.l.b16 %v430
    %v694 = vunpack.c.l.b16 %v431
    %v695 = vunpack.c.l.b16 %v432
    %v696 = vunpack.c.l.b16 %v433
    %v697 = vunpack.c.l.b16 %v434
    %v698 = vunpack.c.l.b16 %v435
    %v699 = vunpack.c.l.b16 %v436
    %v700 = vunpack.c.l.b16 %v437
    %v701 = vunpack.c.l.b16 %v438
    %v702 = vunpack.c.l.b16 %v439
    %v703 = vunpack.c.l.b16 %v440
    %v704 = vunpack.c.l.b16 %v441
    %v705 = vunpack.c.l.b16 %v442
    %v706 = vunpack.c.l.b16 %v443
    %v707 = vunpack.c.l.b16 %v444
    %v708 = vunpack.c.l.b16 %v445
    %v709 = vunpack.c.l.b16 %v446
    %v710 = vunpack.c.l.b16 %v447
    %v711 = vunpack.c.l.b16 %v448
    %v712 = vunpack.c.l.b16 %v449
    %v713 = vunpack.c.l.b16 %v450
    %v714 = vunpack.c.l.b16 %v451
    %v715 = vunpack.c.l.b16 %v452
    %v716 = vunpack.c.l.b16 %v453
    %v717 = vunpack.c.l.b16 %v454
    %v718 = vunpack.c.l.b16 %v455
    %v719 = vunpack.c.l.b16 %v456
    %v720 = vunpack.c.l.b16 %v457
    %v721 = vunpack.c.l.b16 %v458
    %v722 = vunpack.c.l.b16 %v459
    %v723 = vunpack.c.l.b16 %v460
    %v724 = vunpack.c.l.b16 %v461
    %v725 = vunpack.c.l.b16 %v462
    %v726 = vunpack.c.l.b16 %v463
    %v727 = vunpack.c.l.b16 %v464
    %v728 = vunpack.c.l.b16 %v465
    %v729 = vunpack.c.l.b16 %v466
    %v730 = vunpack.c.l.b16 %v467
    %v731 = vunpack.c.l.b16 %v468
    %v732 = vunpack.c.l.b16 %v469
    %v733 = vunpack.c.l.b16 %v470
    %v734 = vunpack.c.l.b16 %v471
    %v735 = vunpack.c.l.b16 %v472
    %v736 = vunpack.c.l.b16 %v473
    %v737 = vunpack.c.l.b16 %v474
    %v738 = vunpack.c.l.b16 %v475
    %v739 = vunpack.c.l.b16 %v476
    %v740 = vunpack.c.l.b16 %v477
    %v741 = vunpack.c.l.b16 %v478
    %v742 = vunpack.c.l.b16 %v479
    %v743 = vunpack.c.l.b16 %v480
    %v744 = vunpack.c.l.b16 %v481
    %v745 = vunpack.c.l.b16 %v482
    %v746 = vunpack.c.l.b16 %v483
    %v747 = vunpack.c.l.b16 %v484
    %v748 = vunpack.c.l.b16 %v485
    %v749 = vunpack.c.l.b16 %v486
    %v750 = vunpack.c.l.b16 %v487
    %v751 = vunpack.c.l.b16 %v488
    %v752 = vunpack.c.l.b16 %v489
    %v753 = vunpack.c.l.b16 %v490
    %v754 = vunpack.c.l.b16 %v491
    %v755 = vunpack.c.l.b16 %v492
    %v756 = vunpack.c.l.b16 %v493
    %v757 = vunpack.c.l.b16 %v494
    %v758 = vunpack.c.l.b16 %v495
    %v759 = vunpack.c.l.b16 %v496
    %v760 = vunpack.c.l.b16 %v497
    %v761 = vunpack.c.l.b16 %v498
    %v762 = vunpack.c.l.b16 %v499
    %v763 = vunpack.c.l.b16 %v500
    %v764 = vunpack.c.l.b16 %v501
    %v765 = vunpack.c.l.b16 %v502
    %v766 = vunpack.c.l.b16 %v503
    %v767 = vunpack.c.l.b16 %v504
    %v768 = vunpack.c.l.b16 %v505
    %v769 = vunpack.c.l.b16 %v506
    %v770 = vunpack.c.l.b16 %v507
    %v771 = vunpack.c.l.b16 %v508
    %v772 = vunpack.c.l.b16 %v509
    %v773 = vunpack.c.l.b16 %v510
    %v774 = vunpack.c.l.b16 %v511
    %v775 = vunpack.c.l.b16 %v512
    %v776 = vunpack.c.l.b16 %v513
    %v777 = vunpack.c.l.b16 %v514
    %v778 = vunpack.c.l.b16 %v515
    %v779 = vunpack.c.l.b16 %v516
    %v780 = vunpack.c.l.b16 %v517
    %v781 = vunpack.c.l.b16 %v518
    %v782 = vunpack.c.l.b16 %v519
    %v783 = vunpack.c.l.b16 %v520
    %v784 = vunpack.c.l.b16 %v521
    %v785 = vunpack.c.l.b16 %v522
    %v786 = vunpack.c.l.b16 %v523
    %v787 = vunpack.c.l.b16 %v524
    %v788 = vunpack.c.l.b16 %v525
    %v789 = vunpack.c.l.b16 %v526
    %v790 = vunpack.c.l.b16 %v527
    %v791 = vunpack.c.l.b16 %v528
    %v792 = vunpack.c.l.b16 %v529
    %v793 = vunpack.c.l.b16 %v530
    %v794 = vunpack.c.l.b16 %v531
    %v795 = vunpack.c.l.b16 %v532
    %v796 = vunpack.c.l.b16 %v533
    %v797 = vunpack.c.l.b16 %v534
    %v798 = vunpack.c.l.b16 %v535
    %v799 = vunpack.c.l.b16 %v536
    %v800 = vunpack.c.l.b16 %v537
    %v801 = vunpack.c.l.b16 %v538
    %v802 = vunpack.c.l.b16 %v539
    %v803 = vunpack.c.l.b16 %v540
    %v804 = vunpack.c.l.b16 %v541
    %v805 = vunpack.c.l.b16 %v542
    %v806 = vunpack.c.l.b16 %v543
    %v807 = vpack.c.b16 %v680, %v679
    %v808 = vpack.c.b16 %v682, %v681
    %v809 = vpack.c.b16 %v684, %v683
    %v810 = vpack.c.b16 %v686, %v685
    %v811 = vpack.c.b16 %v688, %v687
    %v812 = vpack.c.b16 %v690, %v689
    %v813 = vpack.c.b16 %v692, %v691
    %v814 = vpack.c.b16 %v694, %v693
    %v815 = vpack.c.b16 %v696, %v695
    %v816 = vpack.c.b16 %v698, %v697
    %v817 = vpack.c.b16 %v700, %v699
    %v818 = vpack.c.b16 %v702, %v701
    %v819 = vpack.c.b16 %v704, %v703
    %v820 = vpack.c.b16 %v706, %v705
    %v821 = vpack.c.b16 %v708, %v707
    %v822 = vpack.c.b16 %v710, %v709
    %v823 = vpack.c.b16 %v712, %v711
    %v824 = vpack.c.b16 %v714, %v713
    %v825 = vpack.c.b16 %v716, %v715
    %v826 = vpack.c.b16 %v718, %v717
    %v827 = vpack.c.b16 %v720, %v719
    %v828 = vpack.c.b16 %v722, %v721
    %v829 = vpack.c.b16 %v724, %v723
    %v830 = vpack.c.b16 %v726, %v725
    %v831 = vpack.c.b16 %v728, %v727
    %v832 = vpack.c.b16 %v730, %v729
    %v833 = vpack.c.b16 %v732, %v731
    %v834 = vpack.c.b16 %v734, %v733
    %v835 = vpack.c.b16 %v736, %v735
    %v836 = vpack.c.b16 %v738, %v737
    %v837 = vpack.c.b16 %v740, %v739
    %v838 = vpack.c.b16 %v742, %v741
    %v839 = vpack.c.b16 %v744, %v743
    %v840 = vpack.c.b16 %v746, %v745
    %v841 = vpack.c.b16 %v748, %v747
    %v842 = vpack.c.b16 %v750, %v749
    %v843 = vpack.c.b16 %v752, %v751
    %v844 = vpack.c.b16 %v754, %v753
    %v845 = vpack.c.b16 %v756, %v755
    %v846 = vpack.c.b16 %v758, %v757
    %v847 = vpack.c.b16 %v760, %v759
    %v848 = vpack.c.b16 %v762, %v761
    %v849 = vpack.c.b16 %v764, %v763
    %v850 = vpack.c.b16 %v766, %v765
    %v851 = vpack.c.b16 %v768, %v767
    %v852 = vpack.c.b16 %v770, %v769
    %v853 = vpack.c.b16 %v772, %v771
    %v854 = vpack.c.b16 %v774, %v773
    %v855 = vpack.c.b16 %v776, %v775
    %v856 = vpack.c.b16 %v778, %v777
    %v857 = vpack.c.b16 %v780, %v779
    %v858 = vpack.c.b16 %v782, %v781
    %v859 = vpack.c.b16 %v784, %v783
    %v860 = vpack.c.b16 %v786, %v785
    %v861 = vpack.c.b16 %v788, %v787
    %v862 = vpack.c.b16 %v790, %v789
    %v863 = vpack.c.b16 %v792, %v791
    %v864 = vpack.c.b16 %v794, %v793
    %v865 = vpack.c.b16 %v796, %v795
    %v866 = vpack.c.b16 %v798, %v797
    %v867 = vpack.c.b16 %v800, %v799
    %v868 = vpack.c.b16 %v802, %v801
    %v869 = vpack.c.b16 %v804, %v803
    %v870 = vpack.c.b16 %v806, %v805
    %935 = vmatprep.subr.bf16.mxu0 0
    %936 = vmatpush1.bf16.msra.mxu0 %v814
    %937 = vmatprep.subr.bf16.mxu0 0
    %938 = vmatpush1.bf16.msra.mxu0 %v813
    %939 = vmatprep.subr.bf16.mxu0 0
    %940 = vmatpush1.bf16.msra.mxu0 %v812
    %941 = vmatprep.subr.bf16.mxu0 0
    %942 = vmatpush1.bf16.msra.mxu0 %v811
    %943 = vmatprep.subr.bf16.mxu0 0
    %944 = vmatpush1.bf16.msra.mxu0 %v810
    %945 = vmatprep.subr.bf16.mxu0 0
    %946 = vmatpush1.bf16.msra.mxu0 %v809
    %947 = vmatprep.subr.bf16.mxu0 0
    %948 = vmatpush1.bf16.msra.mxu0 %v808
    %949 = vmatprep.subr.bf16.mxu0 0
    %950 = vmatpush1.bf16.msra.mxu0 %v807
    %951 = vmatprep.subr.bf16.mxu0 0
    %952 = vmatpush2.bf16.msra.mxu0 %v822
    %953 = vmatprep.subr.bf16.mxu0 0
    %954 = vmatpush2.bf16.msra.mxu0 %v821
    %955 = vmatprep.subr.bf16.mxu0 0
    %956 = vmatpush2.bf16.msra.mxu0 %v820
    %957 = vmatprep.subr.bf16.mxu0 0
    %958 = vmatpush2.bf16.msra.mxu0 %v819
    %959 = vmatprep.subr.bf16.mxu0 0
    %960 = vmatpush2.bf16.msra.mxu0 %v818
    %961 = vmatprep.subr.bf16.mxu0 0
    %962 = vmatpush2.bf16.msra.mxu0 %v817
    %963 = vmatprep.subr.bf16.mxu0 0
    %964 = vmatpush2.bf16.msra.mxu0 %v816
    %965 = vmatprep.subr.bf16.mxu0 0
    %966 = vmatpush2.bf16.msra.mxu0 %v815
    %967 = vmatprep.mubr.bf16.mxu0 %v409
    %968 = vmatmul.mubr.bf16.gmra.mxu0 %v408
    %v969 = vpop.f32.mrf.mxu0
    %v970 = vadd.f32 %v549, %v969
    %v971 = vpop.f32.mrf.mxu0
    %v972 = vpop.f32.mrf.mxu0
    %v973 = vadd.f32 %v549, %v972
    %v974 = vpop.f32.mrf.mxu0
    %975 = vdwg.mxu0
    %976 = vmatprep.subr.bf16.mxu0 0
    %977 = vmatpush1.bf16.msra.mxu0 %v830
    %978 = vmatprep.subr.bf16.mxu0 0
    %979 = vmatpush1.bf16.msra.mxu0 %v829
    %980 = vmatprep.subr.bf16.mxu0 0
    %981 = vmatpush1.bf16.msra.mxu0 %v828
    %982 = vmatprep.subr.bf16.mxu0 0
    %983 = vmatpush1.bf16.msra.mxu0 %v827
    %984 = vmatprep.subr.bf16.mxu0 0
    %985 = vmatpush1.bf16.msra.mxu0 %v826
    %986 = vmatprep.subr.bf16.mxu0 0
    %987 = vmatpush1.bf16.msra.mxu0 %v825
    %988 = vmatprep.subr.bf16.mxu0 0
    %989 = vmatpush1.bf16.msra.mxu0 %v824
    %990 = vmatprep.subr.bf16.mxu0 0
    %991 = vmatpush1.bf16.msra.mxu0 %v823
    %992 = vmatprep.subr.bf16.mxu0 0
    %993 = vmatpush2.bf16.msra.mxu0 %v838
    %994 = vmatprep.subr.bf16.mxu0 0
    %995 = vmatpush2.bf16.msra.mxu0 %v837
    %996 = vmatprep.subr.bf16.mxu0 0
    %997 = vmatpush2.bf16.msra.mxu0 %v836
    %998 = vmatprep.subr.bf16.mxu0 0
    %999 = vmatpush2.bf16.msra.mxu0 %v835
    %1000 = vmatprep.subr.bf16.mxu0 0
    %1001 = vmatpush2.bf16.msra.mxu0 %v834
    %1002 = vmatprep.subr.bf16.mxu0 0
    %1003 = vmatpush2.bf16.msra.mxu0 %v833
    %1004 = vmatprep.subr.bf16.mxu0 0
    %1005 = vmatpush2.bf16.msra.mxu0 %v832
    %1006 = vmatprep.subr.bf16.mxu0 0
    %1007 = vmatpush2.bf16.msra.mxu0 %v831
    %1008 = vmatprep.mubr.bf16.mxu0 %v411
    %1009 = vmatmul.mubr.bf16.gmra.mxu0 %v410
    %v1010 = vpop.f32.mrf.mxu0
    %v1011 = vadd.f32 %v970, %v1010
    %v1012 = vpop.f32.mrf.mxu0
    %v1013 = vpop.f32.mrf.mxu0
    %v1014 = vadd.f32 %v973, %v1013
    %v1015 = vpop.f32.mrf.mxu0
    %1016 = vdwg.mxu0
    %1017 = vmatprep.subr.bf16.mxu0 0
    %1018 = vmatpush1.bf16.msra.mxu0 %v846
    %1019 = vmatprep.subr.bf16.mxu0 0
    %1020 = vmatpush1.bf16.msra.mxu0 %v845
    %1021 = vmatprep.subr.bf16.mxu0 0
    %1022 = vmatpush1.bf16.msra.mxu0 %v844
    %1023 = vmatprep.subr.bf16.mxu0 0
    %1024 = vmatpush1.bf16.msra.mxu0 %v843
    %1025 = vmatprep.subr.bf16.mxu0 0
    %1026 = vmatpush1.bf16.msra.mxu0 %v842
    %1027 = vmatprep.subr.bf16.mxu0 0
    %1028 = vmatpush1.bf16.msra.mxu0 %v841
    %1029 = vmatprep.subr.bf16.mxu0 0
    %1030 = vmatpush1.bf16.msra.mxu0 %v840
    %1031 = vmatprep.subr.bf16.mxu0 0
    %1032 = vmatpush1.bf16.msra.mxu0 %v839
    %1033 = vmatprep.subr.bf16.mxu0 0
    %1034 = vmatpush2.bf16.msra.mxu0 %v854
    %1035 = vmatprep.subr.bf16.mxu0 0
    %1036 = vmatpush2.bf16.msra.mxu0 %v853
    %1037 = vmatprep.subr.bf16.mxu0 0
    %1038 = vmatpush2.bf16.msra.mxu0 %v852
    %1039 = vmatprep.subr.bf16.mxu0 0
    %1040 = vmatpush2.bf16.msra.mxu0 %v851
    %1041 = vmatprep.subr.bf16.mxu0 0
    %1042 = vmatpush2.bf16.msra.mxu0 %v850
    %1043 = vmatprep.subr.bf16.mxu0 0
    %1044 = vmatpush2.bf16.msra.mxu0 %v849
    %1045 = vmatprep.subr.bf16.mxu0 0
    %1046 = vmatpush2.bf16.msra.mxu0 %v848
    %1047 = vmatprep.subr.bf16.mxu0 0
    %1048 = vmatpush2.bf16.msra.mxu0 %v847
    %1049 = vmatprep.mubr.bf16.mxu0 %v413
    %1050 = vmatmul.mubr.bf16.gmra.mxu0 %v412
    %v1051 = vpop.f32.mrf.mxu0
    %v1052 = vadd.f32 %v1011, %v1051
    %v1053 = vpop.f32.mrf.mxu0
    %v1054 = vpop.f32.mrf.mxu0
    %v1055 = vadd.f32 %v1014, %v1054
    %v1056 = vpop.f32.mrf.mxu0
    %1057 = vdwg.mxu0
    %1058 = vmatprep.subr.bf16.mxu0 0
    %1059 = vmatpush1.bf16.msra.mxu0 %v862
    %1060 = vmatprep.subr.bf16.mxu0 0
    %1061 = vmatpush1.bf16.msra.mxu0 %v861
    %1062 = vmatprep.subr.bf16.mxu0 0
    %1063 = vmatpush1.bf16.msra.mxu0 %v860
    %1064 = vmatprep.subr.bf16.mxu0 0
    %1065 = vmatpush1.bf16.msra.mxu0 %v859
    %1066 = vmatprep.subr.bf16.mxu0 0
    %1067 = vmatpush1.bf16.msra.mxu0 %v858
    %1068 = vmatprep.subr.bf16.mxu0 0
    %1069 = vmatpush1.bf16.msra.mxu0 %v857
    %1070 = vmatprep.subr.bf16.mxu0 0
    %1071 = vmatpush1.bf16.msra.mxu0 %v856
    %1072 = vmatprep.subr.bf16.mxu0 0
    %1073 = vmatpush1.bf16.msra.mxu0 %v855
    %1074 = vmatprep.subr.bf16.mxu0 0
    %1075 = vmatpush2.bf16.msra.mxu0 %v870
    %1076 = vmatprep.subr.bf16.mxu0 0
    %1077 = vmatpush2.bf16.msra.mxu0 %v869
    %1078 = vmatprep.subr.bf16.mxu0 0
    %1079 = vmatpush2.bf16.msra.mxu0 %v868
    %1080 = vmatprep.subr.bf16.mxu0 0
    %1081 = vmatpush2.bf16.msra.mxu0 %v867
    %1082 = vmatprep.subr.bf16.mxu0 0
    %1083 = vmatpush2.bf16.msra.mxu0 %v866
    %1084 = vmatprep.subr.bf16.mxu0 0
    %1085 = vmatpush2.bf16.msra.mxu0 %v865
    %1086 = vmatprep.subr.bf16.mxu0 0
    %1087 = vmatpush2.bf16.msra.mxu0 %v864
    %1088 = vmatprep.subr.bf16.mxu0 0
    %1089 = vmatpush2.bf16.msra.mxu0 %v863
    %1090 = vmatprep.mubr.bf16.mxu0 %v415
    %1091 = vmatmul.mubr.bf16.gmra.mxu0 %v414
    %v1092 = vpop.f32.mrf.mxu0
    %v1093 = vadd.f32 %v1052, %v1092
    %v1094 = vpop.f32.mrf.mxu0
    %v1095 = vpop.f32.mrf.mxu0
    %v1096 = vadd.f32 %v1055, %v1095
    %v1097 = vpop.f32.mrf.mxu0
    %1098 = vdwg.mxu0
    %v1099 = vmul.f32 %v1093, %v1093
    %v1100 = vmul.f32 %v1096, %v1096
    %1101 = vadd.xlane.f32.xlu0 %v1099
    %v1102 = vpop.xlane.xlu0 %1101
    %1103 = vadd.xlane.f32.xlu0 %v1100
    %v1104 = vpop.xlane.xlu0 %1103
    %v1105 = vmax.f32 %v1102, 1e-24
    %v1106 = vmax.f32 %v1104, 1e-24
    %v1107 = vrsqrt.pop %v1105
    %v1108 = vrsqrt.pop %v1106
    %v1109 = vmul.f32 %v1093, %v1107
    %v1110 = vmul.f32 %v1096, %v1108
    %1111 = vst [vmem:[#allocation10] sm:$0xff] %v1109
    %1112 = vst [vmem:[#allocation10 + $0x8] sm:$0xff] %v1110
    // Predicated region
    $region38: #{tpu_custom_call.1} parent=1 // pred_check
      _
    $region39: #{tpu_custom_call.1} parent=1 // pred_check_branch
      %1114 = sbr.rel (0) target = $region41
    $region40: #{tpu_custom_call.1} parent=1 // pred_region
      %s1116 = ssub.s32 256, 256
      %1117 = vsyncadd [#allocation4], %s1116
      %s1118 = sshll.u32 [#allocation10], 4
      %s1119 = int_to_ptr.vmem [resolvable:$true] %s1118
      %1124 = dma.vmem_to_hbm [thread:$0]  %s1119, 256, %s5, [#allocation4], 128, 128, 8
    $region41: #{tpu_custom_call.1} parent=1 // pred_fallthru
      _
    // Predicated region
    $region42: #{tpu_custom_call.1} parent=1 // pred_check
      _
    $region43: #{tpu_custom_call.1} parent=1 // pred_check_branch
      %1126 = sbr.rel (0) target = $region45
    $region44: #{tpu_custom_call.1} parent=1 // pred_region
      %1127 = dma.done [#allocation4], 256
    $region45: #{tpu_custom_call.1} parent=1 // pred_fallthru
      _
    %1128 = vsyncpa [#allocation3], 1
    %1129 = vsyncpa [#allocation6], 1
    %1130 = vsyncpa [#allocation9], 1
    %1131 = vsyncpa [#allocation4], 1

</llo_original>
